<compile_context>
chip_gen: v7x
topology: tpu7x:2x2x1
jax: 0.10.0
libtpu: 0.0.40
codegen_flags: <defaults>
</compile_context>

<pallas_src>
import numpy as np
import jax
import jax.numpy as jnp
from jax.experimental import pallas as pl
from jax.experimental.pallas import tpu as pltpu

N_EVENTS = 32                  # matches the module default
N_SAMPLES = 128                # small n_samples for the example
N_COEFFS = N_SAMPLES // 2 + 1  # 65 true rfft bins
K_PAD = 128                    # lane-aligned padded coefficient count
_TWO_PI_OVER_K = float(2.0 * np.pi / N_COEFFS)


def _fft_shift_kernel(ev_ref, pos_ref, cf_ref, sf_ref, gr_ref, gi_ref, out_ref):
    x = ev_ref[...].astype(jnp.bfloat16)                       # (TM, N)

    # forward rfft (ortho): two bf16 MXU matmuls, f32 accumulation (no concat/slice)
    xr = jnp.dot(x, cf_ref[...], preferred_element_type=jnp.float32)   # (TM, K_PAD)
    xi = jnp.dot(x, sf_ref[...], preferred_element_type=jnp.float32)   # (TM, K_PAD)

    # phase exp(2j*pi*k/K * (1 - pos) * N/2); theta built in-kernel (iota -> VALU)
    k_lane = jax.lax.broadcasted_iota(jnp.int32, (1, K_PAD), 1).astype(jnp.float32)
    theta = k_lane * _TWO_PI_OVER_K                            # (1, K_PAD)
    s = (1.0 - pos_ref[...]) * (N_SAMPLES * 0.5)               # (TM, 1)
    ph = theta * s                                             # (TM, K_PAD)
    pr = jnp.cos(ph)                                           # EUP
    pi_ = jnp.sin(ph)                                          # EUP

    # complex multiply (xr + i*xi) * (pr + i*pi_)   (padded bins carry zero coeffs)
    yr = (xr * pr - xi * pi_).astype(jnp.bfloat16)
    yi = (xr * pi_ + xi * pr).astype(jnp.bfloat16)

    # inverse rfft (ortho): two bf16 MXU matmuls summed in f32
    out = (jnp.dot(yr, gr_ref[...], preferred_element_type=jnp.float32)
           + jnp.dot(yi, gi_ref[...], preferred_element_type=jnp.float32))
    out_ref[...] = out.astype(out_ref.dtype)


def _dft_matrices(n: int, k: int, k_pad: int):
    """Real DFT / inverse-DFT bases (ortho norm), K padded to k_pad lanes."""
    t = np.arange(n)
    kk = np.arange(k)
    ang = 2.0 * np.pi * np.outer(t, kk) / n                    # (N, K)
    scale = 1.0 / np.sqrt(n)                                   # ortho norm

    cf = np.zeros((n, k_pad), np.float32)
    sf = np.zeros((n, k_pad), np.float32)
    cf[:, :k] = np.cos(ang) * scale                            # rfft real part
    sf[:, :k] = -np.sin(ang) * scale                           # rfft imag part

    w = np.full((k,), 2.0)
    w[0] = 1.0
    if n % 2 == 0:
        w[-1] = 1.0                                            # Nyquist bin weight
    gr = np.zeros((k_pad, n), np.float32)
    gi = np.zeros((k_pad, n), np.float32)
    gr[:k, :] = w[:, None] * np.cos(ang.T) * scale             # irfft from real part
    gi[:k, :] = -w[:, None] * np.sin(ang.T) * scale            # irfft from imag part
    return cf, sf, gr, gi


_CF_NP, _SF_NP, _GR_NP, _GI_NP = _dft_matrices(N_SAMPLES, N_COEFFS, K_PAD)


def _pick_tm(m: int) -> int:
    # 256 fills the 256-wide MXU rows on v6e/v7x; 128 fills v5e; otherwise the
    # largest divisor keeps blocks exact (no ragged edge).
    for tm in (256, 128, 64, 32, 16, 8):
        if m % tm == 0:
            return tm
    return m


@jax.jit
def fft_shift_scheduler(events: jax.Array, pos: jax.Array) -> jax.Array:
    """events: (B, n_events, n_samples) f32, pos: (B, n_events, 1) f32."""
    b, e, n = events.shape
    assert n == N_SAMPLES and pos.shape == (b, e, 1)
    m = b * e
    tm = _pick_tm(m)
    grid = (m // tm,)

    ev2d = events.reshape(m, n).astype(jnp.float32)
    pos2d = pos.reshape(m, 1).astype(jnp.float32)
    cf = jnp.asarray(_CF_NP, dtype=jnp.bfloat16)
    sf = jnp.asarray(_SF_NP, dtype=jnp.bfloat16)
    gr = jnp.asarray(_GR_NP, dtype=jnp.bfloat16)
    gi = jnp.asarray(_GI_NP, dtype=jnp.bfloat16)

    flops = 8 * m * n * K_PAD                                  # 4 matmuls
    transcendentals = 2 * m * K_PAD                            # cos + sin of the phase
    bytes_accessed = (4 * (m * n * 2 + m)                      # events + out + pos (f32)
                      + 2 * (4 * n * K_PAD))                   # four bf16 bases

    out = pl.pallas_call(
        _fft_shift_kernel,
        out_shape=jax.ShapeDtypeStruct((m, n), jnp.float32),
        grid=grid,
        in_specs=[
            pl.BlockSpec((tm, n), lambda i: (i, 0)),           # events row tile
            pl.BlockSpec((tm, 1), lambda i: (i, 0)),           # pos row tile
            pl.BlockSpec((n, K_PAD), lambda i: (0, 0)),        # cos fwd basis (resident)
            pl.BlockSpec((n, K_PAD), lambda i: (0, 0)),        # sin fwd basis (resident)
            pl.BlockSpec((K_PAD, n), lambda i: (0, 0)),        # inv real basis (resident)
            pl.BlockSpec((K_PAD, n), lambda i: (0, 0)),        # inv imag basis (resident)
        ],
        out_specs=pl.BlockSpec((tm, n), lambda i: (i, 0)),
        compiler_params=pltpu.CompilerParams(
            dimension_semantics=("parallel",)),                # both TCs on v7x when batched
        cost_estimate=pl.CostEstimate(flops=flops,
                                      transcendentals=transcendentals,
                                      bytes_accessed=bytes_accessed),
    )(ev2d, pos2d, cf, sf, gr, gi)
    return out.reshape(b, e, n)


def _reference_np(events, pos):
    # host-side float64 reference replicating the PyTorch fft_shift semantics
    events = np.asarray(events, dtype=np.float64)
    pos = np.asarray(pos, dtype=np.float64)
    shift = 1.0 - pos
    n = events.shape[-1]
    shift_samples = shift * n * 0.5
    spec = np.fft.rfft(events, axis=-1, norm="ortho")
    k = spec.shape[-1]
    ang = np.arange(k) * 2j * np.pi / k
    spec = spec * np.exp(ang * shift_samples)
    return np.fft.irfft(spec, axis=-1, norm="ortho")


if __name__ == "__main__":
    key = jax.random.PRNGKey(0)
    k_pos, k_ev, k_posb, k_evb = jax.random.split(key, 4)

    # module-shaped case: pos parameter ~ uniform(0, 1), events (1, n_events, n_samples)
    pos = jax.random.uniform(k_pos, (1, N_EVENTS, 1), dtype=jnp.float32)
    events = jax.random.normal(k_ev, (1, N_EVENTS, N_SAMPLES), dtype=jnp.float32)
    out = jax.block_until_ready(fft_shift_scheduler(events, pos))
    ref = _reference_np(events, pos)
    # tolerance reflects single-pass bf16 MXU math on O(1) ortho-scaled signals
    np.testing.assert_allclose(np.asarray(out), ref, atol=2e-2, rtol=2e-2)

    # batched case: exercises the multi-step "parallel" grid with VMEM-resident bases
    pos_b = jax.random.uniform(k_posb, (16, N_EVENTS, 1), dtype=jnp.float32)
    events_b = jax.random.normal(k_evb, (16, N_EVENTS, N_SAMPLES), dtype=jnp.float32)
    out_b = jax.block_until_ready(fft_shift_scheduler(events_b, pos_b))
    ref_b = _reference_np(events_b, pos_b)
    np.testing.assert_allclose(np.asarray(out_b), ref_b, atol=2e-2, rtol=2e-2)

    print("KERNEL_OK")
</pallas_src>

<mosaic_0001>
module attributes {stable_mosaic.version = 11 : i64} {
  func.func @_fft_shift_kernel(%arg0: i32, %arg1: memref<32x128xf32, #tpu.memory_space<vmem>>, %arg2: memref<32x1xf32, #tpu.memory_space<vmem>>, %arg3: memref<128x128xbf16, #tpu.memory_space<vmem>>, %arg4: memref<128x128xbf16, #tpu.memory_space<vmem>>, %arg5: memref<128x128xbf16, #tpu.memory_space<vmem>>, %arg6: memref<128x128xbf16, #tpu.memory_space<vmem>>, %arg7: memref<32x128xf32, #tpu.memory_space<vmem>>) attributes {dimension_semantics = [#tpu.dimension_semantics<parallel>], iteration_bounds = array<i64: 1>, scalar_prefetch = 0 : i64, scratch_operands = 0 : i64, tpu.core_type = #tpu.core_type<tc>, window_params = [{transform_indices = @transform_0, window_bounds = array<i64: 32, 128>}, {transform_indices = @transform_1, window_bounds = array<i64: 32, 1>}, {pipeline_mode = #tpu.pipeline_mode<synchronous>, transform_indices = @transform_2, window_bounds = array<i64: 128, 128>}, {pipeline_mode = #tpu.pipeline_mode<synchronous>, transform_indices = @transform_3, window_bounds = array<i64: 128, 128>}, {pipeline_mode = #tpu.pipeline_mode<synchronous>, transform_indices = @transform_4, window_bounds = array<i64: 128, 128>}, {pipeline_mode = #tpu.pipeline_mode<synchronous>, transform_indices = @transform_5, window_bounds = array<i64: 128, 128>}, {transform_indices = @transform_6, window_bounds = array<i64: 32, 128>}]} {
    %c0 = arith.constant 0 : index
    %c0_0 = arith.constant 0 : index
    %0 = vector.load %arg1[%c0, %c0_0] : memref<32x128xf32, #tpu.memory_space<vmem>>, vector<32x128xf32>
    %1 = arith.truncf %0 : vector<32x128xf32> to vector<32x128xbf16>
    %c0_1 = arith.constant 0 : index
    %c0_2 = arith.constant 0 : index
    %2 = vector.load %arg3[%c0_1, %c0_2] : memref<128x128xbf16, #tpu.memory_space<vmem>>, vector<128x128xbf16>
    %cst = arith.constant dense<0.000000e+00> : vector<32x128xf32>
    %3 = tpu.matmul %1, %2, %cst {dimension_numbers = #tpu.dot_dimension_numbers<[1], [0], [0], [1], [0, 0, 1, 1], [], []>} : vector<32x128xbf16>, vector<128x128xbf16>, vector<32x128xf32> -> vector<32x128xf32>
    %c0_3 = arith.constant 0 : index
    %c0_4 = arith.constant 0 : index
    %4 = vector.load %arg4[%c0_3, %c0_4] : memref<128x128xbf16, #tpu.memory_space<vmem>>, vector<128x128xbf16>
    %cst_5 = arith.constant dense<0.000000e+00> : vector<32x128xf32>
    %5 = tpu.matmul %1, %4, %cst_5 {dimension_numbers = #tpu.dot_dimension_numbers<[1], [0], [0], [1], [0, 0, 1, 1], [], []>} : vector<32x128xbf16>, vector<128x128xbf16>, vector<32x128xf32> -> vector<32x128xf32>
    %6 = tpu.iota {dimensions = array<i32: 1>} : vector<1x128xi32>
    %7 = arith.sitofp %6 : vector<1x128xi32> to vector<1x128xf32>
    %cst_6 = arith.constant 0.0966643914 : f32
    %8 = vector.broadcast %cst_6 : f32 to vector<1x128xf32>
    %9 = arith.mulf %7, %8 : vector<1x128xf32>
    %c0_7 = arith.constant 0 : index
    %c0_8 = arith.constant 0 : index
    %10 = vector.load %arg2[%c0_7, %c0_8] : memref<32x1xf32, #tpu.memory_space<vmem>>, vector<32x1xf32>
    %cst_9 = arith.constant 1.000000e+00 : f32
    %11 = vector.broadcast %cst_9 : f32 to vector<32x1xf32>
    %12 = arith.subf %11, %10 : vector<32x1xf32>
    %cst_10 = arith.constant 6.400000e+01 : f32
    %13 = vector.broadcast %cst_10 : f32 to vector<32x1xf32>
    %14 = arith.mulf %12, %13 : vector<32x1xf32>
    %15 = vector.broadcast %9 : vector<1x128xf32> to vector<32x128xf32>
    %16 = vector.broadcast %14 : vector<32x1xf32> to vector<32x128xf32>
    %17 = arith.mulf %15, %16 : vector<32x128xf32>
    %18 = math.cos %17 : vector<32x128xf32>
    %19 = math.sin %17 : vector<32x128xf32>
    %20 = arith.mulf %3, %18 : vector<32x128xf32>
    %21 = arith.mulf %5, %19 : vector<32x128xf32>
    %22 = arith.subf %20, %21 : vector<32x128xf32>
    %23 = arith.truncf %22 : vector<32x128xf32> to vector<32x128xbf16>
    %24 = arith.mulf %3, %19 : vector<32x128xf32>
    %25 = arith.mulf %5, %18 : vector<32x128xf32>
    %26 = arith.addf %24, %25 : vector<32x128xf32>
    %27 = arith.truncf %26 : vector<32x128xf32> to vector<32x128xbf16>
    %c0_11 = arith.constant 0 : index
    %c0_12 = arith.constant 0 : index
    %28 = vector.load %arg5[%c0_11, %c0_12] : memref<128x128xbf16, #tpu.memory_space<vmem>>, vector<128x128xbf16>
    %cst_13 = arith.constant dense<0.000000e+00> : vector<32x128xf32>
    %29 = tpu.matmul %23, %28, %cst_13 {dimension_numbers = #tpu.dot_dimension_numbers<[1], [0], [0], [1], [0, 0, 1, 1], [], []>} : vector<32x128xbf16>, vector<128x128xbf16>, vector<32x128xf32> -> vector<32x128xf32>
    %c0_14 = arith.constant 0 : index
    %c0_15 = arith.constant 0 : index
    %30 = vector.load %arg6[%c0_14, %c0_15] : memref<128x128xbf16, #tpu.memory_space<vmem>>, vector<128x128xbf16>
    %cst_16 = arith.constant dense<0.000000e+00> : vector<32x128xf32>
    %31 = tpu.matmul %27, %30, %cst_16 {dimension_numbers = #tpu.dot_dimension_numbers<[1], [0], [0], [1], [0, 0, 1, 1], [], []>} : vector<32x128xbf16>, vector<128x128xbf16>, vector<32x128xf32> -> vector<32x128xf32>
    %32 = arith.addf %29, %31 : vector<32x128xf32>
    %c0_17 = arith.constant 0 : index
    %c0_18 = arith.constant 0 : index
    %33 = vector.load %arg7[%c0_17, %c0_18] : memref<32x128xf32, #tpu.memory_space<vmem>>, vector<32x128xf32>
    tpu.vector_store %arg7[%c0_17, %c0_18], %32 {strides = array<i32>} : memref<32x128xf32, #tpu.memory_space<vmem>>, vector<32x128xf32>,
    return
  }
  func.func @transform_0(%arg0: i32) -> (i32, i32) {
    %c0_i32 = arith.constant 0 : i32
    %c0_i32_0 = arith.constant 0 : i32
    return %arg0, %c0_i32 : i32, i32
  }
  func.func @transform_1(%arg0: i32) -> (i32, i32) {
    %c0_i32 = arith.constant 0 : i32
    %c0_i32_0 = arith.constant 0 : i32
    return %arg0, %c0_i32 : i32, i32
  }
  func.func @transform_2(%arg0: i32) -> (i32, i32) {
    %c0_i32 = arith.constant 0 : i32
    %c0_i32_0 = arith.constant 0 : i32
    %c0_i32_1 = arith.constant 0 : i32
    return %c0_i32, %c0_i32_0 : i32, i32
  }
  func.func @transform_3(%arg0: i32) -> (i32, i32) {
    %c0_i32 = arith.constant 0 : i32
    %c0_i32_0 = arith.constant 0 : i32
    %c0_i32_1 = arith.constant 0 : i32
    return %c0_i32, %c0_i32_0 : i32, i32
  }
  func.func @transform_4(%arg0: i32) -> (i32, i32) {
    %c0_i32 = arith.constant 0 : i32
    %c0_i32_0 = arith.constant 0 : i32
    %c0_i32_1 = arith.constant 0 : i32
    return %c0_i32, %c0_i32_0 : i32, i32
  }
  func.func @transform_5(%arg0: i32) -> (i32, i32) {
    %c0_i32 = arith.constant 0 : i32
    %c0_i32_0 = arith.constant 0 : i32
    %c0_i32_1 = arith.constant 0 : i32
    return %c0_i32, %c0_i32_0 : i32, i32
  }
  func.func @transform_6(%arg0: i32) -> (i32, i32) {
    %c0_i32 = arith.constant 0 : i32
    %c0_i32_0 = arith.constant 0 : i32
    return %arg0, %c0_i32 : i32, i32
  }
}

</mosaic_0001>

<llo_original>
// kernel: fft_shift_scheduler.1
$region0: #{fft_shift_scheduler.1}
  #allocation0 [shape = 'u32[]', space=smem, size = 0x4, offset = 0x4, fixed_abs, tag = 'smem constant byte address 0x4 - core index']
  #allocation1 [shape = 'u32[144,128]{1,0:T(1,128)}', space=vmem, size = 0x12000, scoped, tag = 'internal scratch']
  %s0 = inlined_call_operand.hbm [shape: f32[32,128], index: 0, kind: input, shape index: {}]
  %s1 = inlined_call_operand.vmem [shape: f32[32,1], index: 1, kind: input, shape index: {}]
  %s2 = inlined_call_operand.hbm [shape: bf16[128,128], index: 2, kind: input, shape index: {}]
  %s3 = inlined_call_operand.hbm [shape: bf16[128,128], index: 3, kind: input, shape index: {}]
  %s4 = inlined_call_operand.hbm [shape: bf16[128,128], index: 4, kind: input, shape index: {}]
  %s5 = inlined_call_operand.vmem [shape: bf16[128,128], index: 5, kind: input, shape index: {}]
  %s6 = inlined_call_operand.hbm [shape: f32[32,128], index: 6, kind: output, shape index: {}]
  %s7 = sld [smem:[#allocation0]]
  $region50: #{fft_shift_scheduler.1} parent=0
    _
  %s9 = ssub.s32 1, %s7
  %s10 = scalar_select 0, %s9, %s7
  $region1: #{fft_shift_scheduler.1} parent=0
    #allocation2 [shape = 'u8[16384]{0}', space=vmem, size = 0x4000, scoped, tag = 'input window, operand 0, single buffered']
    #allocation3 [shape = 's32[1]{0}', space=sflag, size = 0x4, scoped, tag = 'scoped memory for fft_shift_scheduler.1']
    #allocation4 [shape = 's32[1]{0}', space=sflag, size = 0x4, scoped, tag = 'scoped memory for fft_shift_scheduler.1']
    #allocation5 [shape = 'u8[32768]{0}', space=vmem, size = 0x8000, scoped, tag = 'input window, operand 2, single buffered']
    #allocation6 [shape = 's32[1]{0}', space=sflag, size = 0x4, scoped, tag = 'scoped memory for fft_shift_scheduler.1']
    #allocation7 [shape = 'u8[32768]{0}', space=vmem, size = 0x8000, scoped, tag = 'input window, operand 3, single buffered']
    #allocation8 [shape = 'u8[32768]{0}', space=vmem, size = 0x8000, scoped, tag = 'input window, operand 4, single buffered']
    #allocation9 [shape = 's32[1]{0}', space=sflag, size = 0x4, scoped, tag = 'scoped memory for fft_shift_scheduler.1']
    #allocation10 [shape = 'u8[16384]{0}', space=vmem, size = 0x4000, scoped, tag = 'output window, operand 0, single buffered']
    %11 = vsyncpa [#allocation3], 0
    %12 = vsyncpa [#allocation6], 0
    %13 = vsyncpa [#allocation9], 0
    %14 = vsyncpa [#allocation4], 0
    // Predicated region
    $region2: #{fft_shift_scheduler.1} parent=1 // pred_check
      _
    $region3: #{fft_shift_scheduler.1} parent=1 // pred_check_branch
      %16 = sbr.rel (0) target = $region5
    $region4: #{fft_shift_scheduler.1} parent=1 // pred_region
      %s18 = ssub.s32 512, 512
      %19 = vsyncadd [#allocation3], %s18
      %s20 = sshll.u32 [#allocation2], 4
      %s21 = int_to_ptr.vmem [resolvable:$true] %s20
      %26 = dma.hbm_to_vmem [thread:$0]  %s0, 512, %s21, [#allocation3], 128, 128, 8
    $region5: #{fft_shift_scheduler.1} parent=1 // pred_fallthru
      _
    // Predicated region
    $region6: #{fft_shift_scheduler.1} parent=1 // pred_check
      _
    $region7: #{fft_shift_scheduler.1} parent=1 // pred_check_branch
      %28 = sbr.rel (0) target = $region9
    $region8: #{fft_shift_scheduler.1} parent=1 // pred_region
      _
    $region9: #{fft_shift_scheduler.1} parent=1 // pred_fallthru
      _
    // Predicated region
    $region10: #{fft_shift_scheduler.1} parent=1 // pred_check
      _
    $region11: #{fft_shift_scheduler.1} parent=1 // pred_check_branch
      %30 = sbr.rel (0) target = $region13
    $region12: #{fft_shift_scheduler.1} parent=1 // pred_region
      %s32 = ssub.s32 1024, 1024
      %33 = vsyncadd [#allocation6], %s32
      %s34 = sshll.u32 [#allocation5], 4
      %s35 = int_to_ptr.vmem [resolvable:$true] %s34
      %40 = dma.hbm_to_vmem [thread:$0]  %s2, 1024, %s35, [#allocation6], 64, 64, 4
    $region13: #{fft_shift_scheduler.1} parent=1 // pred_fallthru
      _
    // Predicated region
    $region14: #{fft_shift_scheduler.1} parent=1 // pred_check
      _
    $region15: #{fft_shift_scheduler.1} parent=1 // pred_check_branch
      %42 = sbr.rel (0) target = $region17
    $region16: #{fft_shift_scheduler.1} parent=1 // pred_region
      %s44 = ssub.s32 1024, 1024
      %45 = vsyncadd [#allocation6], %s44
      %s46 = sshll.u32 [#allocation7], 4
      %s47 = int_to_ptr.vmem [resolvable:$true] %s46
      %52 = dma.hbm_to_vmem [thread:$0]  %s3, 1024, %s47, [#allocation6], 64, 64, 4
    $region17: #{fft_shift_scheduler.1} parent=1 // pred_fallthru
      _
    // Predicated region
    $region18: #{fft_shift_scheduler.1} parent=1 // pred_check
      _
    $region19: #{fft_shift_scheduler.1} parent=1 // pred_check_branch
      %54 = sbr.rel (0) target = $region21
    $region20: #{fft_shift_scheduler.1} parent=1 // pred_region
      %s56 = ssub.s32 1024, 1024
      %57 = vsyncadd [#allocation9], %s56
      %s58 = sshll.u32 [#allocation8], 4
      %s59 = int_to_ptr.vmem [resolvable:$true] %s58
      %64 = dma.hbm_to_vmem [thread:$0]  %s4, 1024, %s59, [#allocation9], 64, 64, 4
    $region21: #{fft_shift_scheduler.1} parent=1 // pred_fallthru
      _
    // Predicated region
    $region22: #{fft_shift_scheduler.1} parent=1 // pred_check
      _
    $region23: #{fft_shift_scheduler.1} parent=1 // pred_check_branch
      %66 = sbr.rel (0) target = $region25
    $region24: #{fft_shift_scheduler.1} parent=1 // pred_region
      _
    $region25: #{fft_shift_scheduler.1} parent=1 // pred_fallthru
      _
    // Predicated region
    $region26: #{fft_shift_scheduler.1} parent=1 // pred_check
      _
    $region27: #{fft_shift_scheduler.1} parent=1 // pred_check_branch
      %68 = sbr.rel (0) target = $region29
    $region28: #{fft_shift_scheduler.1} parent=1 // pred_region
      %69 = dma.done [#allocation3], 512
    $region29: #{fft_shift_scheduler.1} parent=1 // pred_fallthru
      _
    // Predicated region
    $region30: #{fft_shift_scheduler.1} parent=1 // pred_check
      _
    $region31: #{fft_shift_scheduler.1} parent=1 // pred_check_branch
      %71 = sbr.rel (0) target = $region33
    $region32: #{fft_shift_scheduler.1} parent=1 // pred_region
      %72 = dma.done [#allocation6], 1024
    $region33: #{fft_shift_scheduler.1} parent=1 // pred_fallthru
      _
    // Predicated region
    $region34: #{fft_shift_scheduler.1} parent=1 // pred_check
      _
    $region35: #{fft_shift_scheduler.1} parent=1 // pred_check_branch
      %74 = sbr.rel (0) target = $region37
    $region36: #{fft_shift_scheduler.1} parent=1 // pred_region
      %75 = dma.done [#allocation6], 1024
    $region37: #{fft_shift_scheduler.1} parent=1 // pred_fallthru
      _
    // Predicated region
    $region38: #{fft_shift_scheduler.1} parent=1 // pred_check
      _
    $region39: #{fft_shift_scheduler.1} parent=1 // pred_check_branch
      %77 = sbr.rel (0) target = $region41
    $region40: #{fft_shift_scheduler.1} parent=1 // pred_region
      %78 = dma.done [#allocation9], 1024
    $region41: #{fft_shift_scheduler.1} parent=1 // pred_fallthru
      _
    %v80 = vld [vmem:[#allocation2] sm:$0xff]
    %v81 = vld [vmem:[#allocation2 + $0x8] sm:$0xff]
    %v82 = vld [vmem:[#allocation2 + $0x10] sm:$0xff]
    %v83 = vld [vmem:[#allocation2 + $0x18] sm:$0xff]
    %v84 = vpack.c.bf16 %v81, %v80
    %v85 = vpack.c.bf16 %v83, %v82
    %v86 = vld [vmem:[#allocation5] sm:$0xf]
    %v87 = vld [vmem:[#allocation5 + $0x4] sm:$0xf]
    %v88 = vld [vmem:[#allocation5 + $0x8] sm:$0xf]
    %v89 = vld [vmem:[#allocation5 + $0xc] sm:$0xf]
    %v90 = vld [vmem:[#allocation5 + $0x10] sm:$0xf]
    %v91 = vld [vmem:[#allocation5 + $0x14] sm:$0xf]
    %v92 = vld [vmem:[#allocation5 + $0x18] sm:$0xf]
    %v93 = vld [vmem:[#allocation5 + $0x1c] sm:$0xf]
    %v94 = vld [vmem:[#allocation5 + $0x20] sm:$0xf]
    %v95 = vld [vmem:[#allocation5 + $0x24] sm:$0xf]
    %v96 = vld [vmem:[#allocation5 + $0x28] sm:$0xf]
    %v97 = vld [vmem:[#allocation5 + $0x2c] sm:$0xf]
    %v98 = vld [vmem:[#allocation5 + $0x30] sm:$0xf]
    %v99 = vld [vmem:[#allocation5 + $0x34] sm:$0xf]
    %v100 = vld [vmem:[#allocation5 + $0x38] sm:$0xf]
    %v101 = vld [vmem:[#allocation5 + $0x3c] sm:$0xf]
    %v118 = vunpack.c.l.b16 %v86
    %v119 = vunpack.c.l.b16 %v87
    %v120 = vunpack.c.l.b16 %v88
    %v121 = vunpack.c.l.b16 %v89
    %v122 = vunpack.c.l.b16 %v90
    %v123 = vunpack.c.l.b16 %v91
    %v124 = vunpack.c.l.b16 %v92
    %v125 = vunpack.c.l.b16 %v93
    %v126 = vunpack.c.l.b16 %v94
    %v127 = vunpack.c.l.b16 %v95
    %v128 = vunpack.c.l.b16 %v96
    %v129 = vunpack.c.l.b16 %v97
    %v130 = vunpack.c.l.b16 %v98
    %v131 = vunpack.c.l.b16 %v99
    %v132 = vunpack.c.l.b16 %v100
    %v133 = vunpack.c.l.b16 %v101
    %v134 = vpack.c.b16 %v119, %v118
    %v135 = vpack.c.b16 %v121, %v120
    %v136 = vpack.c.b16 %v123, %v122
    %v137 = vpack.c.b16 %v125, %v124
    %v138 = vpack.c.b16 %v127, %v126
    %v139 = vpack.c.b16 %v129, %v128
    %v140 = vpack.c.b16 %v131, %v130
    %v141 = vpack.c.b16 %v133, %v132
    %150 = vmatprep.subr.bf16.mxu0 0
    %151 = vmatpush1.bf16.msra.mxu0 %v134
    %152 = vmatprep.subr.bf16.mxu0 0
    %153 = vmatpush1.bf16.msra.mxu0 %v135
    %154 = vmatprep.subr.bf16.mxu0 0
    %155 = vmatpush1.bf16.msra.mxu0 %v136
    %156 = vmatprep.subr.bf16.mxu0 0
    %157 = vmatpush1.bf16.msra.mxu0 %v137
    %158 = vmatprep.subr.bf16.mxu0 0
    %159 = vmatpush1.bf16.msra.mxu0 %v138
    %160 = vmatprep.subr.bf16.mxu0 0
    %161 = vmatpush1.bf16.msra.mxu0 %v139
    %162 = vmatprep.subr.bf16.mxu0 0
    %163 = vmatpush1.bf16.msra.mxu0 %v140
    %164 = vmatprep.subr.bf16.mxu0 0
    %165 = vmatpush1.bf16.msra.mxu0 %v141
    %166 = vmatprep.subr.bf16.mxu0 0
    %167 = vmatpush1.bf16.msra.mxu0 0
    %168 = vmatprep.subr.bf16.mxu0 0
    %169 = vmatpush1.bf16.msra.mxu0 0
    %170 = vmatprep.subr.bf16.mxu0 0
    %171 = vmatpush1.bf16.msra.mxu0 0
    %172 = vmatprep.subr.bf16.mxu0 0
    %173 = vmatpush1.bf16.msra.mxu0 0
    %174 = vmatprep.subr.bf16.mxu0 0
    %175 = vmatpush1.bf16.msra.mxu0 0
    %176 = vmatprep.subr.bf16.mxu0 0
    %177 = vmatpush1.bf16.msra.mxu0 0
    %178 = vmatprep.subr.bf16.mxu0 0
    %179 = vmatpush1.bf16.msra.mxu0 0
    %180 = vmatprep.subr.bf16.mxu0 0
    %181 = vmatpush1.bf16.msra.mxu0 0
    %182 = vmatprep.mubr.bf16.mxu0 0
    %183 = vmatmul.mubr.bf16.gmra.mrb[0].mxu0 %v84
    %v184 = vpop.f32.mrb[0].mxu0
    %v185 = vadd.f32 0.0, %v184
    %v186 = vpop.f32.mrb[0].mxu0
    %v187 = vpop.f32.mrb[0].mxu0
    %v188 = vadd.f32 0.0, %v187
    %v189 = vpop.f32.mrb[0].mxu0
    %190 = vmatprep.mubr.bf16.mxu0 0
    %191 = vmatmul.mubr.bf16.gmra.mrb[0].mxu0 %v85
    %v192 = vpop.f32.mrb[0].mxu0
    %v193 = vadd.f32 0.0, %v192
    %v194 = vpop.f32.mrb[0].mxu0
    %v195 = vpop.f32.mrb[0].mxu0
    %v196 = vadd.f32 0.0, %v195
    %v197 = vpop.f32.mrb[0].mxu0
    %198 = vdwg.mxu0
    %v199 = vld [vmem:[#allocation7] sm:$0xf]
    %v200 = vld [vmem:[#allocation7 + $0x4] sm:$0xf]
    %v201 = vld [vmem:[#allocation7 + $0x8] sm:$0xf]
    %v202 = vld [vmem:[#allocation7 + $0xc] sm:$0xf]
    %v203 = vld [vmem:[#allocation7 + $0x10] sm:$0xf]
    %v204 = vld [vmem:[#allocation7 + $0x14] sm:$0xf]
    %v205 = vld [vmem:[#allocation7 + $0x18] sm:$0xf]
    %v206 = vld [vmem:[#allocation7 + $0x1c] sm:$0xf]
    %v207 = vld [vmem:[#allocation7 + $0x20] sm:$0xf]
    %v208 = vld [vmem:[#allocation7 + $0x24] sm:$0xf]
    %v209 = vld [vmem:[#allocation7 + $0x28] sm:$0xf]
    %v210 = vld [vmem:[#allocation7 + $0x2c] sm:$0xf]
    %v211 = vld [vmem:[#allocation7 + $0x30] sm:$0xf]
    %v212 = vld [vmem:[#allocation7 + $0x34] sm:$0xf]
    %v213 = vld [vmem:[#allocation7 + $0x38] sm:$0xf]
    %v214 = vld [vmem:[#allocation7 + $0x3c] sm:$0xf]
    %v231 = vunpack.c.l.b16 %v199
    %v232 = vunpack.c.l.b16 %v200
    %v233 = vunpack.c.l.b16 %v201
    %v234 = vunpack.c.l.b16 %v202
    %v235 = vunpack.c.l.b16 %v203
    %v236 = vunpack.c.l.b16 %v204
    %v237 = vunpack.c.l.b16 %v205
    %v238 = vunpack.c.l.b16 %v206
    %v239 = vunpack.c.l.b16 %v207
    %v240 = vunpack.c.l.b16 %v208
    %v241 = vunpack.c.l.b16 %v209
    %v242 = vunpack.c.l.b16 %v210
    %v243 = vunpack.c.l.b16 %v211
    %v244 = vunpack.c.l.b16 %v212
    %v245 = vunpack.c.l.b16 %v213
    %v246 = vunpack.c.l.b16 %v214
    %v247 = vpack.c.b16 %v232, %v231
    %v248 = vpack.c.b16 %v234, %v233
    %v249 = vpack.c.b16 %v236, %v235
    %v250 = vpack.c.b16 %v238, %v237
    %v251 = vpack.c.b16 %v240, %v239
    %v252 = vpack.c.b16 %v242, %v241
    %v253 = vpack.c.b16 %v244, %v243
    %v254 = vpack.c.b16 %v246, %v245
    %263 = vmatprep.subr.bf16.mxu0 0
    %264 = vmatpush1.bf16.msra.mxu0 %v247
    %265 = vmatprep.subr.bf16.mxu0 0
    %266 = vmatpush1.bf16.msra.mxu0 %v248
    %267 = vmatprep.subr.bf16.mxu0 0
    %268 = vmatpush1.bf16.msra.mxu0 %v249
    %269 = vmatprep.subr.bf16.mxu0 0
    %270 = vmatpush1.bf16.msra.mxu0 %v250
    %271 = vmatprep.subr.bf16.mxu0 0
    %272 = vmatpush1.bf16.msra.mxu0 %v251
    %273 = vmatprep.subr.bf16.mxu0 0
    %274 = vmatpush1.bf16.msra.mxu0 %v252
    %275 = vmatprep.subr.bf16.mxu0 0
    %276 = vmatpush1.bf16.msra.mxu0 %v253
    %277 = vmatprep.subr.bf16.mxu0 0
    %278 = vmatpush1.bf16.msra.mxu0 %v254
    %279 = vmatprep.subr.bf16.mxu0 0
    %280 = vmatpush1.bf16.msra.mxu0 0
    %281 = vmatprep.subr.bf16.mxu0 0
    %282 = vmatpush1.bf16.msra.mxu0 0
    %283 = vmatprep.subr.bf16.mxu0 0
    %284 = vmatpush1.bf16.msra.mxu0 0
    %285 = vmatprep.subr.bf16.mxu0 0
    %286 = vmatpush1.bf16.msra.mxu0 0
    %287 = vmatprep.subr.bf16.mxu0 0
    %288 = vmatpush1.bf16.msra.mxu0 0
    %289 = vmatprep.subr.bf16.mxu0 0
    %290 = vmatpush1.bf16.msra.mxu0 0
    %291 = vmatprep.subr.bf16.mxu0 0
    %292 = vmatpush1.bf16.msra.mxu0 0
    %293 = vmatprep.subr.bf16.mxu0 0
    %294 = vmatpush1.bf16.msra.mxu0 0
    %295 = vmatprep.mubr.bf16.mxu0 0
    %296 = vmatmul.mubr.bf16.gmra.mrb[0].mxu0 %v84
    %v297 = vpop.f32.mrb[0].mxu0
    %v298 = vadd.f32 0.0, %v297
    %v299 = vpop.f32.mrb[0].mxu0
    %v300 = vpop.f32.mrb[0].mxu0
    %v301 = vadd.f32 0.0, %v300
    %v302 = vpop.f32.mrb[0].mxu0
    %303 = vmatprep.mubr.bf16.mxu0 0
    %304 = vmatmul.mubr.bf16.gmra.mrb[0].mxu0 %v85
    %v305 = vpop.f32.mrb[0].mxu0
    %v306 = vadd.f32 0.0, %v305
    %v307 = vpop.f32.mrb[0].mxu0
    %v308 = vpop.f32.mrb[0].mxu0
    %v309 = vadd.f32 0.0, %v308
    %v310 = vpop.f32.mrb[0].mxu0
    %311 = vdwg.mxu0
    %v312 = vlaneseq
    %v313 = vand.u32 %v312, 127
    %v314 = vcvt.s32.f32 %v313
    %v315 = vmul.f32 %v314, 0.09666439
    %v316 = vld [vmem:[%s1] sm:$0xff]
    %v317 = vld [vmem:[%s1 + $0x8] sm:$0xff]
    %v318 = vld [vmem:[%s1 + $0x10] sm:$0xff]
    %v319 = vld [vmem:[%s1 + $0x18] sm:$0xff]
    %v320 = vsub.f32 1.0, %v316
    %v321 = vsub.f32 1.0, %v317
    %v322 = vsub.f32 1.0, %v318
    %v323 = vsub.f32 1.0, %v319
    %v324 = vmul.f32 %v320, 64.0
    %v325 = vmul.f32 %v321, 64.0
    %v326 = vmul.f32 %v322, 64.0
    %v327 = vmul.f32 %v323, 64.0
    %329 = vset.pattern.permute.xlu0 0
    %330 = vperm.xlu0 %329, %v324
    %v331 = vpop.permute.xlu0 %330
    %334 = vset.pattern.permute.xlu0 0
    %335 = vperm.xlu0 %334, %v325
    %v336 = vpop.permute.xlu0 %335
    %339 = vset.pattern.permute.xlu0 0
    %340 = vperm.xlu0 %339, %v326
    %v341 = vpop.permute.xlu0 %340
    %344 = vset.pattern.permute.xlu0 0
    %345 = vperm.xlu0 %344, %v327
    %v346 = vpop.permute.xlu0 %345
    %v348 = vmul.f32 %v315, %v331
    %v349 = vmul.f32 %v315, %v336
    %v350 = vmul.f32 %v315, %v341
    %v351 = vmul.f32 %v315, %v346
    %v352 = vand.u32 2147483647, %v348
    %vm353 = vcmp.le.f32.partialorder %v352, 0.7853982
    %vm354 = vcmp.lt.s32.totalorder %v348, 0
    %v355 = vand.u32 %v348, 2139095040
    %v356 = vshrl.u32 %v355, 23
    %v357 = vsub.s32 %v356, 127
    %v358 = vand.u32 2147483647, %v348
    %v359 = vand.u32 %v358, 8388607
    %v360 = vor.u32 %v359, 8388608
    %v361 = vsub.s32 0, %v360
    %v362 = vadd.s32 %v357, 1
    %vm363 = vcmp.gt.s32.totalorder %v362, 0
    %v364 = vsel %vm363, %v362, 0
    %v365 = vshrl.u32 %v364, 5
    %v366 = vand.u32 %v364, 31
    %v367 = vsub.s32 32, %v366
    %v368 = vshrl.u32 683565275, %v367
    %v369 = vshll.u32 683565275, %v366
    %v370 = vshrl.u32 2475754826, %v367
    %v371 = vor.u32 %v369, %v370
    %v372 = vshll.u32 2475754826, %v366
    %v373 = vshrl.u32 2131351028, %v367
    %v374 = vor.u32 %v372, %v373
    %v375 = vshll.u32 2131351028, %v366
    %v376 = vshrl.u32 2102212464, %v367
    %v377 = vor.u32 %v375, %v376
    %v378 = vshll.u32 2102212464, %v366
    %v379 = vshrl.u32 920167782, %v367
    %v380 = vor.u32 %v378, %v379
    %v381 = vshll.u32 920167782, %v366
    %v382 = vshrl.u32 1326507024, %v367
    %v383 = vor.u32 %v381, %v382
    %vm384 = vcmp.lt.s32.totalorder %v365, 1
    %vm385 = vcmp.lt.s32.totalorder %v365, 2
    %vm386 = vcmp.lt.s32.totalorder %v365, 3
    %vm387 = vcmp.lt.s32.totalorder %v365, 4
    %v388 = vsel %vm384, %v368, %v371
    %v389 = vsel %vm387, %v377, 2102212464
    %v390 = vsel %vm386, %v374, %v389
    %v391 = vsel %vm385, %v388, %v390
    %v392 = vsel %vm384, %v371, %v374
    %v393 = vsel %vm387, %v380, 920167782
    %v394 = vsel %vm386, %v377, %v393
    %v395 = vsel %vm385, %v392, %v394
    %v396 = vsel %vm384, %v374, %v377
    %v397 = vsel %vm387, %v383, 1326507024
    %v398 = vsel %vm386, %v380, %v397
    %v399 = vsel %vm385, %v396, %v398
    %v400 = vshll.u32 %v360, 8
    %v401 = vmul.u32.u64.compose %v400, %v399
    %v402 = vextract.low.u32 %v401
    %v403 = vextract.high.u32 %v401
    %v404 = vmul.u32.u64.compose %v400, %v395
    %v405 = vextract.low.u32 %v404
    %v406 = vextract.high.u32 %v404
    %v407 = vmul.u32 %v400, %v391
    %v408 = vadd.s32 %v403, %v405
    %vm409 = vc.u32 %v403, %v405
    %v410 = vadd.s32 %v406, 1
    %v411 = vsel %vm409, %v410, %v406
    %v412 = vadd.s32 %v407, %v411
    %v413 = vadd.s32 %v412, 536870912
    %v414 = vshrl.u32 %v413, 30
    %v415 = vshll.u32 %v414, 30
    %v416 = vsub.s32 %v412, %v415
    %vm417 = vcmp.lt.s32.totalorder %v416, 0
    %v418 = vsub.s32 0, %v416
    %v419 = vsel %vm417, %v418, %v416
    %v420 = vclz %v419
    %v421 = vsub.s32 %v420, 2
    %vm422 = vcmp.gt.s32.totalorder 0, %v421
    %v423 = vsel %vm422, 0, %v421
    %v424 = vsub.s32 32, %v423
    %v425 = vshll.u32 %v416, %v423
    %v426 = vshrl.u32 %v408, %v424
    %v427 = vor.u32 %v425, %v426
    %v428 = vsub.s32 4294967266, %v423
    %v429 = vadd.s32 %v428, 127
    %v430 = vshll.u32 %v429, 23
    %v431 = vor.u32 4788187, %v430
    %v432 = vand.u32 2147483647, %v431
    %v434 = vcvt.s32.f32 %v427
    %v435 = vmul.f32 %v434, %v432
    %v436 = vxor.u32 %v435, 2147483648
    %v437 = vsel %vm354, %v436, %v435
    %v438 = vsub.s32 4, %v414
    %v439 = vsel %vm354, %v438, %v414
    %v440 = vsel %vm353, %v348, %v437
    %v441 = vsel %vm353, 0, %v439
    %v442 = vcosq.f32.pop %v440
    %v443 = vsinq.f32.pop %v440
    %vm444 = vweird.f32 %v348
    %v445 = vand.u32 %v441, 3
    %vm446 = vcmp.lt.s32.totalorder %v445, 2
    %vm447 = vcmp.eq.s32.totalorder %v445, 0
    %v448 = vxor.u32 %v443, 2147483648
    %v449 = vsel %vm447, %v442, %v448
    %vm450 = vcmp.eq.s32.totalorder %v445, 2
    %v451 = vxor.u32 %v442, 2147483648
    %v452 = vsel %vm450, %v451, %v443
    %v453 = vsel %vm446, %v449, %v452
    %v454 = vsel %vm444, nan, %v453
    %v455 = vand.u32 2147483647, %v349
    %vm456 = vcmp.le.f32.partialorder %v455, 0.7853982
    %vm457 = vcmp.lt.s32.totalorder %v349, 0
    %v458 = vand.u32 %v349, 2139095040
    %v459 = vshrl.u32 %v458, 23
    %v460 = vsub.s32 %v459, 127
    %v461 = vand.u32 2147483647, %v349
    %v462 = vand.u32 %v461, 8388607
    %v463 = vor.u32 %v462, 8388608
    %v464 = vsub.s32 0, %v463
    %v465 = vadd.s32 %v460, 1
    %vm466 = vcmp.gt.s32.totalorder %v465, 0
    %v467 = vsel %vm466, %v465, 0
    %v468 = vshrl.u32 %v467, 5
    %v469 = vand.u32 %v467, 31
    %v470 = vsub.s32 32, %v469
    %v471 = vshrl.u32 683565275, %v470
    %v472 = vshll.u32 683565275, %v469
    %v473 = vshrl.u32 2475754826, %v470
    %v474 = vor.u32 %v472, %v473
    %v475 = vshll.u32 2475754826, %v469
    %v476 = vshrl.u32 2131351028, %v470
    %v477 = vor.u32 %v475, %v476
    %v478 = vshll.u32 2131351028, %v469
    %v479 = vshrl.u32 2102212464, %v470
    %v480 = vor.u32 %v478, %v479
    %v481 = vshll.u32 2102212464, %v469
    %v482 = vshrl.u32 920167782, %v470
    %v483 = vor.u32 %v481, %v482
    %v484 = vshll.u32 920167782, %v469
    %v485 = vshrl.u32 1326507024, %v470
    %v486 = vor.u32 %v484, %v485
    %vm487 = vcmp.lt.s32.totalorder %v468, 1
    %vm488 = vcmp.lt.s32.totalorder %v468, 2
    %vm489 = vcmp.lt.s32.totalorder %v468, 3
    %vm490 = vcmp.lt.s32.totalorder %v468, 4
    %v491 = vsel %vm487, %v471, %v474
    %v492 = vsel %vm490, %v480, 2102212464
    %v493 = vsel %vm489, %v477, %v492
    %v494 = vsel %vm488, %v491, %v493
    %v495 = vsel %vm487, %v474, %v477
    %v496 = vsel %vm490, %v483, 920167782
    %v497 = vsel %vm489, %v480, %v496
    %v498 = vsel %vm488, %v495, %v497
    %v499 = vsel %vm487, %v477, %v480
    %v500 = vsel %vm490, %v486, 1326507024
    %v501 = vsel %vm489, %v483, %v500
    %v502 = vsel %vm488, %v499, %v501
    %v503 = vshll.u32 %v463, 8
    %v504 = vmul.u32.u64.compose %v503, %v502
    %v505 = vextract.low.u32 %v504
    %v506 = vextract.high.u32 %v504
    %v507 = vmul.u32.u64.compose %v503, %v498
    %v508 = vextract.low.u32 %v507
    %v509 = vextract.high.u32 %v507
    %v510 = vmul.u32 %v503, %v494
    %v511 = vadd.s32 %v506, %v508
    %vm512 = vc.u32 %v506, %v508
    %v513 = vadd.s32 %v509, 1
    %v514 = vsel %vm512, %v513, %v509
    %v515 = vadd.s32 %v510, %v514
    %v516 = vadd.s32 %v515, 536870912
    %v517 = vshrl.u32 %v516, 30
    %v518 = vshll.u32 %v517, 30
    %v519 = vsub.s32 %v515, %v518
    %vm520 = vcmp.lt.s32.totalorder %v519, 0
    %v521 = vsub.s32 0, %v519
    %v522 = vsel %vm520, %v521, %v519
    %v523 = vclz %v522
    %v524 = vsub.s32 %v523, 2
    %vm525 = vcmp.gt.s32.totalorder 0, %v524
    %v526 = vsel %vm525, 0, %v524
    %v527 = vsub.s32 32, %v526
    %v528 = vshll.u32 %v519, %v526
    %v529 = vshrl.u32 %v511, %v527
    %v530 = vor.u32 %v528, %v529
    %v531 = vsub.s32 4294967266, %v526
    %v532 = vadd.s32 %v531, 127
    %v533 = vshll.u32 %v532, 23
    %v534 = vor.u32 4788187, %v533
    %v535 = vand.u32 2147483647, %v534
    %v537 = vcvt.s32.f32 %v530
    %v538 = vmul.f32 %v537, %v535
    %v539 = vxor.u32 %v538, 2147483648
    %v540 = vsel %vm457, %v539, %v538
    %v541 = vsub.s32 4, %v517
    %v542 = vsel %vm457, %v541, %v517
    %v543 = vsel %vm456, %v349, %v540
    %v544 = vsel %vm456, 0, %v542
    %v545 = vcosq.f32.pop %v543
    %v546 = vsinq.f32.pop %v543
    %vm547 = vweird.f32 %v349
    %v548 = vand.u32 %v544, 3
    %vm549 = vcmp.lt.s32.totalorder %v548, 2
    %vm550 = vcmp.eq.s32.totalorder %v548, 0
    %v551 = vxor.u32 %v546, 2147483648
    %v552 = vsel %vm550, %v545, %v551
    %vm553 = vcmp.eq.s32.totalorder %v548, 2
    %v554 = vxor.u32 %v545, 2147483648
    %v555 = vsel %vm553, %v554, %v546
    %v556 = vsel %vm549, %v552, %v555
    %v557 = vsel %vm547, nan, %v556
    %v558 = vand.u32 2147483647, %v350
    %vm559 = vcmp.le.f32.partialorder %v558, 0.7853982
    %vm560 = vcmp.lt.s32.totalorder %v350, 0
    %v561 = vand.u32 %v350, 2139095040
    %v562 = vshrl.u32 %v561, 23
    %v563 = vsub.s32 %v562, 127
    %v564 = vand.u32 2147483647, %v350
    %v565 = vand.u32 %v564, 8388607
    %v566 = vor.u32 %v565, 8388608
    %v567 = vsub.s32 0, %v566
    %v568 = vadd.s32 %v563, 1
    %vm569 = vcmp.gt.s32.totalorder %v568, 0
    %v570 = vsel %vm569, %v568, 0
    %v571 = vshrl.u32 %v570, 5
    %v572 = vand.u32 %v570, 31
    %v573 = vsub.s32 32, %v572
    %v574 = vshrl.u32 683565275, %v573
    %v575 = vshll.u32 683565275, %v572
    %v576 = vshrl.u32 2475754826, %v573
    %v577 = vor.u32 %v575, %v576
    %v578 = vshll.u32 2475754826, %v572
    %v579 = vshrl.u32 2131351028, %v573
    %v580 = vor.u32 %v578, %v579
    %v581 = vshll.u32 2131351028, %v572
    %v582 = vshrl.u32 2102212464, %v573
    %v583 = vor.u32 %v581, %v582
    %v584 = vshll.u32 2102212464, %v572
    %v585 = vshrl.u32 920167782, %v573
    %v586 = vor.u32 %v584, %v585
    %v587 = vshll.u32 920167782, %v572
    %v588 = vshrl.u32 1326507024, %v573
    %v589 = vor.u32 %v587, %v588
    %vm590 = vcmp.lt.s32.totalorder %v571, 1
    %vm591 = vcmp.lt.s32.totalorder %v571, 2
    %vm592 = vcmp.lt.s32.totalorder %v571, 3
    %vm593 = vcmp.lt.s32.totalorder %v571, 4
    %v594 = vsel %vm590, %v574, %v577
    %v595 = vsel %vm593, %v583, 2102212464
    %v596 = vsel %vm592, %v580, %v595
    %v597 = vsel %vm591, %v594, %v596
    %v598 = vsel %vm590, %v577, %v580
    %v599 = vsel %vm593, %v586, 920167782
    %v600 = vsel %vm592, %v583, %v599
    %v601 = vsel %vm591, %v598, %v600
    %v602 = vsel %vm590, %v580, %v583
    %v603 = vsel %vm593, %v589, 1326507024
    %v604 = vsel %vm592, %v586, %v603
    %v605 = vsel %vm591, %v602, %v604
    %v606 = vshll.u32 %v566, 8
    %v607 = vmul.u32.u64.compose %v606, %v605
    %v608 = vextract.low.u32 %v607
    %v609 = vextract.high.u32 %v607
    %v610 = vmul.u32.u64.compose %v606, %v601
    %v611 = vextract.low.u32 %v610
    %v612 = vextract.high.u32 %v610
    %v613 = vmul.u32 %v606, %v597
    %v614 = vadd.s32 %v609, %v611
    %vm615 = vc.u32 %v609, %v611
    %v616 = vadd.s32 %v612, 1
    %v617 = vsel %vm615, %v616, %v612
    %v618 = vadd.s32 %v613, %v617
    %v619 = vadd.s32 %v618, 536870912
    %v620 = vshrl.u32 %v619, 30
    %v621 = vshll.u32 %v620, 30
    %v622 = vsub.s32 %v618, %v621
    %vm623 = vcmp.lt.s32.totalorder %v622, 0
    %v624 = vsub.s32 0, %v622
    %v625 = vsel %vm623, %v624, %v622
    %v626 = vclz %v625
    %v627 = vsub.s32 %v626, 2
    %vm628 = vcmp.gt.s32.totalorder 0, %v627
    %v629 = vsel %vm628, 0, %v627
    %v630 = vsub.s32 32, %v629
    %v631 = vshll.u32 %v622, %v629
    %v632 = vshrl.u32 %v614, %v630
    %v633 = vor.u32 %v631, %v632
    %v634 = vsub.s32 4294967266, %v629
    %v635 = vadd.s32 %v634, 127
    %v636 = vshll.u32 %v635, 23
    %v637 = vor.u32 4788187, %v636
    %v638 = vand.u32 2147483647, %v637
    %v640 = vcvt.s32.f32 %v633
    %v641 = vmul.f32 %v640, %v638
    %v642 = vxor.u32 %v641, 2147483648
    %v643 = vsel %vm560, %v642, %v641
    %v644 = vsub.s32 4, %v620
    %v645 = vsel %vm560, %v644, %v620
    %v646 = vsel %vm559, %v350, %v643
    %v647 = vsel %vm559, 0, %v645
    %v648 = vcosq.f32.pop %v646
    %v649 = vsinq.f32.pop %v646
    %vm650 = vweird.f32 %v350
    %v651 = vand.u32 %v647, 3
    %vm652 = vcmp.lt.s32.totalorder %v651, 2
    %vm653 = vcmp.eq.s32.totalorder %v651, 0
    %v654 = vxor.u32 %v649, 2147483648
    %v655 = vsel %vm653, %v648, %v654
    %vm656 = vcmp.eq.s32.totalorder %v651, 2
    %v657 = vxor.u32 %v648, 2147483648
    %v658 = vsel %vm656, %v657, %v649
    %v659 = vsel %vm652, %v655, %v658
    %v660 = vsel %vm650, nan, %v659
    %v661 = vand.u32 2147483647, %v351
    %vm662 = vcmp.le.f32.partialorder %v661, 0.7853982
    %vm663 = vcmp.lt.s32.totalorder %v351, 0
    %v664 = vand.u32 %v351, 2139095040
    %v665 = vshrl.u32 %v664, 23
    %v666 = vsub.s32 %v665, 127
    %v667 = vand.u32 2147483647, %v351
    %v668 = vand.u32 %v667, 8388607
    %v669 = vor.u32 %v668, 8388608
    %v670 = vsub.s32 0, %v669
    %v671 = vadd.s32 %v666, 1
    %vm672 = vcmp.gt.s32.totalorder %v671, 0
    %v673 = vsel %vm672, %v671, 0
    %v674 = vshrl.u32 %v673, 5
    %v675 = vand.u32 %v673, 31
    %v676 = vsub.s32 32, %v675
    %v677 = vshrl.u32 683565275, %v676
    %v678 = vshll.u32 683565275, %v675
    %v679 = vshrl.u32 2475754826, %v676
    %v680 = vor.u32 %v678, %v679
    %v681 = vshll.u32 2475754826, %v675
    %v682 = vshrl.u32 2131351028, %v676
    %v683 = vor.u32 %v681, %v682
    %v684 = vshll.u32 2131351028, %v675
    %v685 = vshrl.u32 2102212464, %v676
    %v686 = vor.u32 %v684, %v685
    %v687 = vshll.u32 2102212464, %v675
    %v688 = vshrl.u32 920167782, %v676
    %v689 = vor.u32 %v687, %v688
    %v690 = vshll.u32 920167782, %v675
    %v691 = vshrl.u32 1326507024, %v676
    %v692 = vor.u32 %v690, %v691
    %vm693 = vcmp.lt.s32.totalorder %v674, 1
    %vm694 = vcmp.lt.s32.totalorder %v674, 2
    %vm695 = vcmp.lt.s32.totalorder %v674, 3
    %vm696 = vcmp.lt.s32.totalorder %v674, 4
    %v697 = vsel %vm693, %v677, %v680
    %v698 = vsel %vm696, %v686, 2102212464
    %v699 = vsel %vm695, %v683, %v698
    %v700 = vsel %vm694, %v697, %v699
    %v701 = vsel %vm693, %v680, %v683
    %v702 = vsel %vm696, %v689, 920167782
    %v703 = vsel %vm695, %v686, %v702
    %v704 = vsel %vm694, %v701, %v703
    %v705 = vsel %vm693, %v683, %v686
    %v706 = vsel %vm696, %v692, 1326507024
    %v707 = vsel %vm695, %v689, %v706
    %v708 = vsel %vm694, %v705, %v707
    %v709 = vshll.u32 %v669, 8
    %v710 = vmul.u32.u64.compose %v709, %v708
    %v711 = vextract.low.u32 %v710
    %v712 = vextract.high.u32 %v710
    %v713 = vmul.u32.u64.compose %v709, %v704
    %v714 = vextract.low.u32 %v713
    %v715 = vextract.high.u32 %v713
    %v716 = vmul.u32 %v709, %v700
    %v717 = vadd.s32 %v712, %v714
    %vm718 = vc.u32 %v712, %v714
    %v719 = vadd.s32 %v715, 1
    %v720 = vsel %vm718, %v719, %v715
    %v721 = vadd.s32 %v716, %v720
    %v722 = vadd.s32 %v721, 536870912
    %v723 = vshrl.u32 %v722, 30
    %v724 = vshll.u32 %v723, 30
    %v725 = vsub.s32 %v721, %v724
    %vm726 = vcmp.lt.s32.totalorder %v725, 0
    %v727 = vsub.s32 0, %v725
    %v728 = vsel %vm726, %v727, %v725
    %v729 = vclz %v728
    %v730 = vsub.s32 %v729, 2
    %vm731 = vcmp.gt.s32.totalorder 0, %v730
    %v732 = vsel %vm731, 0, %v730
    %v733 = vsub.s32 32, %v732
    %v734 = vshll.u32 %v725, %v732
    %v735 = vshrl.u32 %v717, %v733
    %v736 = vor.u32 %v734, %v735
    %v737 = vsub.s32 4294967266, %v732
    %v738 = vadd.s32 %v737, 127
    %v739 = vshll.u32 %v738, 23
    %v740 = vor.u32 4788187, %v739
    %v741 = vand.u32 2147483647, %v740
    %v743 = vcvt.s32.f32 %v736
    %v744 = vmul.f32 %v743, %v741
    %v745 = vxor.u32 %v744, 2147483648
    %v746 = vsel %vm663, %v745, %v744
    %v747 = vsub.s32 4, %v723
    %v748 = vsel %vm663, %v747, %v723
    %v749 = vsel %vm662, %v351, %v746
    %v750 = vsel %vm662, 0, %v748
    %v751 = vcosq.f32.pop %v749
    %v752 = vsinq.f32.pop %v749
    %vm753 = vweird.f32 %v351
    %v754 = vand.u32 %v750, 3
    %vm755 = vcmp.lt.s32.totalorder %v754, 2
    %vm756 = vcmp.eq.s32.totalorder %v754, 0
    %v757 = vxor.u32 %v752, 2147483648
    %v758 = vsel %vm756, %v751, %v757
    %vm759 = vcmp.eq.s32.totalorder %v754, 2
    %v760 = vxor.u32 %v751, 2147483648
    %v761 = vsel %vm759, %v760, %v752
    %v762 = vsel %vm755, %v758, %v761
    %v763 = vsel %vm753, nan, %v762
    %v764 = vand.u32 2147483647, %v348
    %vm765 = vcmp.le.f32.partialorder %v764, 0.7853982
    %vm766 = vcmp.lt.s32.totalorder %v348, 0
    %v767 = vand.u32 %v348, 2139095040
    %v768 = vshrl.u32 %v767, 23
    %v769 = vsub.s32 %v768, 127
    %v770 = vand.u32 2147483647, %v348
    %v771 = vand.u32 %v770, 8388607
    %v772 = vor.u32 %v771, 8388608
    %v773 = vsub.s32 0, %v772
    %v774 = vadd.s32 %v769, 1
    %vm775 = vcmp.gt.s32.totalorder %v774, 0
    %v776 = vsel %vm775, %v774, 0
    %v777 = vshrl.u32 %v776, 5
    %v778 = vand.u32 %v776, 31
    %v779 = vsub.s32 32, %v778
    %v780 = vshrl.u32 683565275, %v779
    %v781 = vshll.u32 683565275, %v778
    %v782 = vshrl.u32 2475754826, %v779
    %v783 = vor.u32 %v781, %v782
    %v784 = vshll.u32 2475754826, %v778
    %v785 = vshrl.u32 2131351028, %v779
    %v786 = vor.u32 %v784, %v785
    %v787 = vshll.u32 2131351028, %v778
    %v788 = vshrl.u32 2102212464, %v779
    %v789 = vor.u32 %v787, %v788
    %v790 = vshll.u32 2102212464, %v778
    %v791 = vshrl.u32 920167782, %v779
    %v792 = vor.u32 %v790, %v791
    %v793 = vshll.u32 920167782, %v778
    %v794 = vshrl.u32 1326507024, %v779
    %v795 = vor.u32 %v793, %v794
    %vm796 = vcmp.lt.s32.totalorder %v777, 1
    %vm797 = vcmp.lt.s32.totalorder %v777, 2
    %vm798 = vcmp.lt.s32.totalorder %v777, 3
    %vm799 = vcmp.lt.s32.totalorder %v777, 4
    %v800 = vsel %vm796, %v780, %v783
    %v801 = vsel %vm799, %v789, 2102212464
    %v802 = vsel %vm798, %v786, %v801
    %v803 = vsel %vm797, %v800, %v802
    %v804 = vsel %vm796, %v783, %v786
    %v805 = vsel %vm799, %v792, 920167782
    %v806 = vsel %vm798, %v789, %v805
    %v807 = vsel %vm797, %v804, %v806
    %v808 = vsel %vm796, %v786, %v789
    %v809 = vsel %vm799, %v795, 1326507024
    %v810 = vsel %vm798, %v792, %v809
    %v811 = vsel %vm797, %v808, %v810
    %v812 = vshll.u32 %v772, 8
    %v813 = vmul.u32.u64.compose %v812, %v811
    %v814 = vextract.low.u32 %v813
    %v815 = vextract.high.u32 %v813
    %v816 = vmul.u32.u64.compose %v812, %v807
    %v817 = vextract.low.u32 %v816
    %v818 = vextract.high.u32 %v816
    %v819 = vmul.u32 %v812, %v803
    %v820 = vadd.s32 %v815, %v817
    %vm821 = vc.u32 %v815, %v817
    %v822 = vadd.s32 %v818, 1
    %v823 = vsel %vm821, %v822, %v818
    %v824 = vadd.s32 %v819, %v823
    %v825 = vadd.s32 %v824, 536870912
    %v826 = vshrl.u32 %v825, 30
    %v827 = vshll.u32 %v826, 30
    %v828 = vsub.s32 %v824, %v827
    %vm829 = vcmp.lt.s32.totalorder %v828, 0
    %v830 = vsub.s32 0, %v828
    %v831 = vsel %vm829, %v830, %v828
    %v832 = vclz %v831
    %v833 = vsub.s32 %v832, 2
    %vm834 = vcmp.gt.s32.totalorder 0, %v833
    %v835 = vsel %vm834, 0, %v833
    %v836 = vsub.s32 32, %v835
    %v837 = vshll.u32 %v828, %v835
    %v838 = vshrl.u32 %v820, %v836
    %v839 = vor.u32 %v837, %v838
    %v840 = vsub.s32 4294967266, %v835
    %v841 = vadd.s32 %v840, 127
    %v842 = vshll.u32 %v841, 23
    %v843 = vor.u32 4788187, %v842
    %v844 = vand.u32 2147483647, %v843
    %v846 = vcvt.s32.f32 %v839
    %v847 = vmul.f32 %v846, %v844
    %v848 = vxor.u32 %v847, 2147483648
    %v849 = vsel %vm766, %v848, %v847
    %v850 = vsub.s32 4, %v826
    %v851 = vsel %vm766, %v850, %v826
    %v852 = vsel %vm765, %v348, %v849
    %v853 = vsel %vm765, 0, %v851
    %v854 = vcosq.f32.pop %v852
    %v855 = vsinq.f32.pop %v852
    %vm856 = vweird.f32 %v348
    %v857 = vadd.s32 %v853, 3
    %v858 = vand.u32 %v857, 3
    %vm859 = vcmp.lt.s32.totalorder %v858, 2
    %vm860 = vcmp.eq.s32.totalorder %v858, 0
    %v861 = vxor.u32 %v855, 2147483648
    %v862 = vsel %vm860, %v854, %v861
    %vm863 = vcmp.eq.s32.totalorder %v858, 2
    %v864 = vxor.u32 %v854, 2147483648
    %v865 = vsel %vm863, %v864, %v855
    %v866 = vsel %vm859, %v862, %v865
    %v867 = vsel %vm856, nan, %v866
    %v868 = vand.u32 2147483647, %v349
    %vm869 = vcmp.le.f32.partialorder %v868, 0.7853982
    %vm870 = vcmp.lt.s32.totalorder %v349, 0
    %v871 = vand.u32 %v349, 2139095040
    %v872 = vshrl.u32 %v871, 23
    %v873 = vsub.s32 %v872, 127
    %v874 = vand.u32 2147483647, %v349
    %v875 = vand.u32 %v874, 8388607
    %v876 = vor.u32 %v875, 8388608
    %v877 = vsub.s32 0, %v876
    %v878 = vadd.s32 %v873, 1
    %vm879 = vcmp.gt.s32.totalorder %v878, 0
    %v880 = vsel %vm879, %v878, 0
    %v881 = vshrl.u32 %v880, 5
    %v882 = vand.u32 %v880, 31
    %v883 = vsub.s32 32, %v882
    %v884 = vshrl.u32 683565275, %v883
    %v885 = vshll.u32 683565275, %v882
    %v886 = vshrl.u32 2475754826, %v883
    %v887 = vor.u32 %v885, %v886
    %v888 = vshll.u32 2475754826, %v882
    %v889 = vshrl.u32 2131351028, %v883
    %v890 = vor.u32 %v888, %v889
    %v891 = vshll.u32 2131351028, %v882
    %v892 = vshrl.u32 2102212464, %v883
    %v893 = vor.u32 %v891, %v892
    %v894 = vshll.u32 2102212464, %v882
    %v895 = vshrl.u32 920167782, %v883
    %v896 = vor.u32 %v894, %v895
    %v897 = vshll.u32 920167782, %v882
    %v898 = vshrl.u32 1326507024, %v883
    %v899 = vor.u32 %v897, %v898
    %vm900 = vcmp.lt.s32.totalorder %v881, 1
    %vm901 = vcmp.lt.s32.totalorder %v881, 2
    %vm902 = vcmp.lt.s32.totalorder %v881, 3
    %vm903 = vcmp.lt.s32.totalorder %v881, 4
    %v904 = vsel %vm900, %v884, %v887
    %v905 = vsel %vm903, %v893, 2102212464
    %v906 = vsel %vm902, %v890, %v905
    %v907 = vsel %vm901, %v904, %v906
    %v908 = vsel %vm900, %v887, %v890
    %v909 = vsel %vm903, %v896, 920167782
    %v910 = vsel %vm902, %v893, %v909
    %v911 = vsel %vm901, %v908, %v910
    %v912 = vsel %vm900, %v890, %v893
    %v913 = vsel %vm903, %v899, 1326507024
    %v914 = vsel %vm902, %v896, %v913
    %v915 = vsel %vm901, %v912, %v914
    %v916 = vshll.u32 %v876, 8
    %v917 = vmul.u32.u64.compose %v916, %v915
    %v918 = vextract.low.u32 %v917
    %v919 = vextract.high.u32 %v917
    %v920 = vmul.u32.u64.compose %v916, %v911
    %v921 = vextract.low.u32 %v920
    %v922 = vextract.high.u32 %v920
    %v923 = vmul.u32 %v916, %v907
    %v924 = vadd.s32 %v919, %v921
    %vm925 = vc.u32 %v919, %v921
    %v926 = vadd.s32 %v922, 1
    %v927 = vsel %vm925, %v926, %v922
    %v928 = vadd.s32 %v923, %v927
    %v929 = vadd.s32 %v928, 536870912
    %v930 = vshrl.u32 %v929, 30
    %v931 = vshll.u32 %v930, 30
    %v932 = vsub.s32 %v928, %v931
    %vm933 = vcmp.lt.s32.totalorder %v932, 0
    %v934 = vsub.s32 0, %v932
    %v935 = vsel %vm933, %v934, %v932
    %v936 = vclz %v935
    %v937 = vsub.s32 %v936, 2
    %vm938 = vcmp.gt.s32.totalorder 0, %v937
    %v939 = vsel %vm938, 0, %v937
    %v940 = vsub.s32 32, %v939
    %v941 = vshll.u32 %v932, %v939
    %v942 = vshrl.u32 %v924, %v940
    %v943 = vor.u32 %v941, %v942
    %v944 = vsub.s32 4294967266, %v939
    %v945 = vadd.s32 %v944, 127
    %v946 = vshll.u32 %v945, 23
    %v947 = vor.u32 4788187, %v946
    %v948 = vand.u32 2147483647, %v947
    %v950 = vcvt.s32.f32 %v943
    %v951 = vmul.f32 %v950, %v948
    %v952 = vxor.u32 %v951, 2147483648
    %v953 = vsel %vm870, %v952, %v951
    %v954 = vsub.s32 4, %v930
    %v955 = vsel %vm870, %v954, %v930
    %v956 = vsel %vm869, %v349, %v953
    %v957 = vsel %vm869, 0, %v955
    %v958 = vcosq.f32.pop %v956
    %v959 = vsinq.f32.pop %v956
    %vm960 = vweird.f32 %v349
    %v961 = vadd.s32 %v957, 3
    %v962 = vand.u32 %v961, 3
    %vm963 = vcmp.lt.s32.totalorder %v962, 2
    %vm964 = vcmp.eq.s32.totalorder %v962, 0
    %v965 = vxor.u32 %v959, 2147483648
    %v966 = vsel %vm964, %v958, %v965
    %vm967 = vcmp.eq.s32.totalorder %v962, 2
    %v968 = vxor.u32 %v958, 2147483648
    %v969 = vsel %vm967, %v968, %v959
    %v970 = vsel %vm963, %v966, %v969
    %v971 = vsel %vm960, nan, %v970
    %v972 = vand.u32 2147483647, %v350
    %vm973 = vcmp.le.f32.partialorder %v972, 0.7853982
    %vm974 = vcmp.lt.s32.totalorder %v350, 0
    %v975 = vand.u32 %v350, 2139095040
    %v976 = vshrl.u32 %v975, 23
    %v977 = vsub.s32 %v976, 127
    %v978 = vand.u32 2147483647, %v350
    %v979 = vand.u32 %v978, 8388607
    %v980 = vor.u32 %v979, 8388608
    %v981 = vsub.s32 0, %v980
    %v982 = vadd.s32 %v977, 1
    %vm983 = vcmp.gt.s32.totalorder %v982, 0
    %v984 = vsel %vm983, %v982, 0
    %v985 = vshrl.u32 %v984, 5
    %v986 = vand.u32 %v984, 31
    %v987 = vsub.s32 32, %v986
    %v988 = vshrl.u32 683565275, %v987
    %v989 = vshll.u32 683565275, %v986
    %v990 = vshrl.u32 2475754826, %v987
    %v991 = vor.u32 %v989, %v990
    %v992 = vshll.u32 2475754826, %v986
    %v993 = vshrl.u32 2131351028, %v987
    %v994 = vor.u32 %v992, %v993
    %v995 = vshll.u32 2131351028, %v986
    %v996 = vshrl.u32 2102212464, %v987
    %v997 = vor.u32 %v995, %v996
    %v998 = vshll.u32 2102212464, %v986
    %v999 = vshrl.u32 920167782, %v987
    %v1000 = vor.u32 %v998, %v999
    %v1001 = vshll.u32 920167782, %v986
    %v1002 = vshrl.u32 1326507024, %v987
    %v1003 = vor.u32 %v1001, %v1002
    %vm1004 = vcmp.lt.s32.totalorder %v985, 1
    %vm1005 = vcmp.lt.s32.totalorder %v985, 2
    %vm1006 = vcmp.lt.s32.totalorder %v985, 3
    %vm1007 = vcmp.lt.s32.totalorder %v985, 4
    %v1008 = vsel %vm1004, %v988, %v991
    %v1009 = vsel %vm1007, %v997, 2102212464
    %v1010 = vsel %vm1006, %v994, %v1009
    %v1011 = vsel %vm1005, %v1008, %v1010
    %v1012 = vsel %vm1004, %v991, %v994
    %v1013 = vsel %vm1007, %v1000, 920167782
    %v1014 = vsel %vm1006, %v997, %v1013
    %v1015 = vsel %vm1005, %v1012, %v1014
    %v1016 = vsel %vm1004, %v994, %v997
    %v1017 = vsel %vm1007, %v1003, 1326507024
    %v1018 = vsel %vm1006, %v1000, %v1017
    %v1019 = vsel %vm1005, %v1016, %v1018
    %v1020 = vshll.u32 %v980, 8
    %v1021 = vmul.u32.u64.compose %v1020, %v1019
    %v1022 = vextract.low.u32 %v1021
    %v1023 = vextract.high.u32 %v1021
    %v1024 = vmul.u32.u64.compose %v1020, %v1015
    %v1025 = vextract.low.u32 %v1024
    %v1026 = vextract.high.u32 %v1024
    %v1027 = vmul.u32 %v1020, %v1011
    %v1028 = vadd.s32 %v1023, %v1025
    %vm1029 = vc.u32 %v1023, %v1025
    %v1030 = vadd.s32 %v1026, 1
    %v1031 = vsel %vm1029, %v1030, %v1026
    %v1032 = vadd.s32 %v1027, %v1031
    %v1033 = vadd.s32 %v1032, 536870912
    %v1034 = vshrl.u32 %v1033, 30
    %v1035 = vshll.u32 %v1034, 30
    %v1036 = vsub.s32 %v1032, %v1035
    %vm1037 = vcmp.lt.s32.totalorder %v1036, 0
    %v1038 = vsub.s32 0, %v1036
    %v1039 = vsel %vm1037, %v1038, %v1036
    %v1040 = vclz %v1039
    %v1041 = vsub.s32 %v1040, 2
    %vm1042 = vcmp.gt.s32.totalorder 0, %v1041
    %v1043 = vsel %vm1042, 0, %v1041
    %v1044 = vsub.s32 32, %v1043
    %v1045 = vshll.u32 %v1036, %v1043
    %v1046 = vshrl.u32 %v1028, %v1044
    %v1047 = vor.u32 %v1045, %v1046
    %v1048 = vsub.s32 4294967266, %v1043
    %v1049 = vadd.s32 %v1048, 127
    %v1050 = vshll.u32 %v1049, 23
    %v1051 = vor.u32 4788187, %v1050
    %v1052 = vand.u32 2147483647, %v1051
    %v1054 = vcvt.s32.f32 %v1047
    %v1055 = vmul.f32 %v1054, %v1052
    %v1056 = vxor.u32 %v1055, 2147483648
    %v1057 = vsel %vm974, %v1056, %v1055
    %v1058 = vsub.s32 4, %v1034
    %v1059 = vsel %vm974, %v1058, %v1034
    %v1060 = vsel %vm973, %v350, %v1057
    %v1061 = vsel %vm973, 0, %v1059
    %v1062 = vcosq.f32.pop %v1060
    %v1063 = vsinq.f32.pop %v1060
    %vm1064 = vweird.f32 %v350
    %v1065 = vadd.s32 %v1061, 3
    %v1066 = vand.u32 %v1065, 3
    %vm1067 = vcmp.lt.s32.totalorder %v1066, 2
    %vm1068 = vcmp.eq.s32.totalorder %v1066, 0
    %v1069 = vxor.u32 %v1063, 2147483648
    %v1070 = vsel %vm1068, %v1062, %v1069
    %vm1071 = vcmp.eq.s32.totalorder %v1066, 2
    %v1072 = vxor.u32 %v1062, 2147483648
    %v1073 = vsel %vm1071, %v1072, %v1063
    %v1074 = vsel %vm1067, %v1070, %v1073
    %v1075 = vsel %vm1064, nan, %v1074
    %v1076 = vand.u32 2147483647, %v351
    %vm1077 = vcmp.le.f32.partialorder %v1076, 0.7853982
    %vm1078 = vcmp.lt.s32.totalorder %v351, 0
    %v1079 = vand.u32 %v351, 2139095040
    %v1080 = vshrl.u32 %v1079, 23
    %v1081 = vsub.s32 %v1080, 127
    %v1082 = vand.u32 2147483647, %v351
    %v1083 = vand.u32 %v1082, 8388607
    %v1084 = vor.u32 %v1083, 8388608
    %v1085 = vsub.s32 0, %v1084
    %v1086 = vadd.s32 %v1081, 1
    %vm1087 = vcmp.gt.s32.totalorder %v1086, 0
    %v1088 = vsel %vm1087, %v1086, 0
    %v1089 = vshrl.u32 %v1088, 5
    %v1090 = vand.u32 %v1088, 31
    %v1091 = vsub.s32 32, %v1090
    %v1092 = vshrl.u32 683565275, %v1091
    %v1093 = vshll.u32 683565275, %v1090
    %v1094 = vshrl.u32 2475754826, %v1091
    %v1095 = vor.u32 %v1093, %v1094
    %v1096 = vshll.u32 2475754826, %v1090
    %v1097 = vshrl.u32 2131351028, %v1091
    %v1098 = vor.u32 %v1096, %v1097
    %v1099 = vshll.u32 2131351028, %v1090
    %v1100 = vshrl.u32 2102212464, %v1091
    %v1101 = vor.u32 %v1099, %v1100
    %v1102 = vshll.u32 2102212464, %v1090
    %v1103 = vshrl.u32 920167782, %v1091
    %v1104 = vor.u32 %v1102, %v1103
    %v1105 = vshll.u32 920167782, %v1090
    %v1106 = vshrl.u32 1326507024, %v1091
    %v1107 = vor.u32 %v1105, %v1106
    %vm1108 = vcmp.lt.s32.totalorder %v1089, 1
    %vm1109 = vcmp.lt.s32.totalorder %v1089, 2
    %vm1110 = vcmp.lt.s32.totalorder %v1089, 3
    %vm1111 = vcmp.lt.s32.totalorder %v1089, 4
    %v1112 = vsel %vm1108, %v1092, %v1095
    %v1113 = vsel %vm1111, %v1101, 2102212464
    %v1114 = vsel %vm1110, %v1098, %v1113
    %v1115 = vsel %vm1109, %v1112, %v1114
    %v1116 = vsel %vm1108, %v1095, %v1098
    %v1117 = vsel %vm1111, %v1104, 920167782
    %v1118 = vsel %vm1110, %v1101, %v1117
    %v1119 = vsel %vm1109, %v1116, %v1118
    %v1120 = vsel %vm1108, %v1098, %v1101
    %v1121 = vsel %vm1111, %v1107, 1326507024
    %v1122 = vsel %vm1110, %v1104, %v1121
    %v1123 = vsel %vm1109, %v1120, %v1122
    %v1124 = vshll.u32 %v1084, 8
    %v1125 = vmul.u32.u64.compose %v1124, %v1123
    %v1126 = vextract.low.u32 %v1125
    %v1127 = vextract.high.u32 %v1125
    %v1128 = vmul.u32.u64.compose %v1124, %v1119
    %v1129 = vextract.low.u32 %v1128
    %v1130 = vextract.high.u32 %v1128
    %v1131 = vmul.u32 %v1124, %v1115
    %v1132 = vadd.s32 %v1127, %v1129
    %vm1133 = vc.u32 %v1127, %v1129
    %v1134 = vadd.s32 %v1130, 1
    %v1135 = vsel %vm1133, %v1134, %v1130
    %v1136 = vadd.s32 %v1131, %v1135
    %v1137 = vadd.s32 %v1136, 536870912
    %v1138 = vshrl.u32 %v1137, 30
    %v1139 = vshll.u32 %v1138, 30
    %v1140 = vsub.s32 %v1136, %v1139
    %vm1141 = vcmp.lt.s32.totalorder %v1140, 0
    %v1142 = vsub.s32 0, %v1140
    %v1143 = vsel %vm1141, %v1142, %v1140
    %v1144 = vclz %v1143
    %v1145 = vsub.s32 %v1144, 2
    %vm1146 = vcmp.gt.s32.totalorder 0, %v1145
    %v1147 = vsel %vm1146, 0, %v1145
    %v1148 = vsub.s32 32, %v1147
    %v1149 = vshll.u32 %v1140, %v1147
    %v1150 = vshrl.u32 %v1132, %v1148
    %v1151 = vor.u32 %v1149, %v1150
    %v1152 = vsub.s32 4294967266, %v1147
    %v1153 = vadd.s32 %v1152, 127
    %v1154 = vshll.u32 %v1153, 23
    %v1155 = vor.u32 4788187, %v1154
    %v1156 = vand.u32 2147483647, %v1155
    %v1158 = vcvt.s32.f32 %v1151
    %v1159 = vmul.f32 %v1158, %v1156
    %v1160 = vxor.u32 %v1159, 2147483648
    %v1161 = vsel %vm1078, %v1160, %v1159
    %v1162 = vsub.s32 4, %v1138
    %v1163 = vsel %vm1078, %v1162, %v1138
    %v1164 = vsel %vm1077, %v351, %v1161
    %v1165 = vsel %vm1077, 0, %v1163
    %v1166 = vcosq.f32.pop %v1164
    %v1167 = vsinq.f32.pop %v1164
    %vm1168 = vweird.f32 %v351
    %v1169 = vadd.s32 %v1165, 3
    %v1170 = vand.u32 %v1169, 3
    %vm1171 = vcmp.lt.s32.totalorder %v1170, 2
    %vm1172 = vcmp.eq.s32.totalorder %v1170, 0
    %v1173 = vxor.u32 %v1167, 2147483648
    %v1174 = vsel %vm1172, %v1166, %v1173
    %vm1175 = vcmp.eq.s32.totalorder %v1170, 2
    %v1176 = vxor.u32 %v1166, 2147483648
    %v1177 = vsel %vm1175, %v1176, %v1167
    %v1178 = vsel %vm1171, %v1174, %v1177
    %v1179 = vsel %vm1168, nan, %v1178
    %v1180 = vmul.f32 %v185, %v454
    %v1181 = vmul.f32 %v188, %v557
    %v1182 = vmul.f32 %v193, %v660
    %v1183 = vmul.f32 %v196, %v763
    %v1184 = vmul.f32 %v298, %v867
    %v1185 = vmul.f32 %v301, %v971
    %v1186 = vmul.f32 %v306, %v1075
    %v1187 = vmul.f32 %v309, %v1179
    %v1188 = vsub.f32 %v1180, %v1184
    %v1189 = vsub.f32 %v1181, %v1185
    %v1190 = vsub.f32 %v1182, %v1186
    %v1191 = vsub.f32 %v1183, %v1187
    %v1192 = vpack.c.bf16 %v1189, %v1188
    %v1193 = vpack.c.bf16 %v1191, %v1190
    %v1194 = vmul.f32 %v185, %v867
    %v1195 = vmul.f32 %v188, %v971
    %v1196 = vmul.f32 %v193, %v1075
    %v1197 = vmul.f32 %v196, %v1179
    %v1198 = vmul.f32 %v298, %v454
    %v1199 = vmul.f32 %v301, %v557
    %v1200 = vmul.f32 %v306, %v660
    %v1201 = vmul.f32 %v309, %v763
    %v1202 = vadd.f32 %v1194, %v1198
    %v1203 = vadd.f32 %v1195, %v1199
    %v1204 = vadd.f32 %v1196, %v1200
    %v1205 = vadd.f32 %v1197, %v1201
    %v1206 = vpack.c.bf16 %v1203, %v1202
    %v1207 = vpack.c.bf16 %v1205, %v1204
    %v1208 = vld [vmem:[#allocation8] sm:$0xf]
    %v1209 = vld [vmem:[#allocation8 + $0x4] sm:$0xf]
    %v1210 = vld [vmem:[#allocation8 + $0x8] sm:$0xf]
    %v1211 = vld [vmem:[#allocation8 + $0xc] sm:$0xf]
    %v1212 = vld [vmem:[#allocation8 + $0x10] sm:$0xf]
    %v1213 = vld [vmem:[#allocation8 + $0x14] sm:$0xf]
    %v1214 = vld [vmem:[#allocation8 + $0x18] sm:$0xf]
    %v1215 = vld [vmem:[#allocation8 + $0x1c] sm:$0xf]
    %v1216 = vld [vmem:[#allocation8 + $0x20] sm:$0xf]
    %v1217 = vld [vmem:[#allocation8 + $0x24] sm:$0xf]
    %v1218 = vld [vmem:[#allocation8 + $0x28] sm:$0xf]
    %v1219 = vld [vmem:[#allocation8 + $0x2c] sm:$0xf]
    %v1220 = vld [vmem:[#allocation8 + $0x30] sm:$0xf]
    %v1221 = vld [vmem:[#allocation8 + $0x34] sm:$0xf]
    %v1222 = vld [vmem:[#allocation8 + $0x38] sm:$0xf]
    %v1223 = vld [vmem:[#allocation8 + $0x3c] sm:$0xf]
    %v1224 = vld [vmem:[%s5] sm:$0xf]
    %v1225 = vld [vmem:[%s5 + $0x4] sm:$0xf]
    %v1226 = vld [vmem:[%s5 + $0x8] sm:$0xf]
    %v1227 = vld [vmem:[%s5 + $0xc] sm:$0xf]
    %v1228 = vld [vmem:[%s5 + $0x10] sm:$0xf]
    %v1229 = vld [vmem:[%s5 + $0x14] sm:$0xf]
    %v1230 = vld [vmem:[%s5 + $0x18] sm:$0xf]
    %v1231 = vld [vmem:[%s5 + $0x1c] sm:$0xf]
    %v1232 = vld [vmem:[%s5 + $0x20] sm:$0xf]
    %v1233 = vld [vmem:[%s5 + $0x24] sm:$0xf]
    %v1234 = vld [vmem:[%s5 + $0x28] sm:$0xf]
    %v1235 = vld [vmem:[%s5 + $0x2c] sm:$0xf]
    %v1236 = vld [vmem:[%s5 + $0x30] sm:$0xf]
    %v1237 = vld [vmem:[%s5 + $0x34] sm:$0xf]
    %v1238 = vld [vmem:[%s5 + $0x38] sm:$0xf]
    %v1239 = vld [vmem:[%s5 + $0x3c] sm:$0xf]
    %v1256 = vunpack.c.l.b16 %v1224
    %v1257 = vunpack.c.l.b16 %v1225
    %v1258 = vunpack.c.l.b16 %v1226
    %v1259 = vunpack.c.l.b16 %v1227
    %v1260 = vunpack.c.l.b16 %v1228
    %v1261 = vunpack.c.l.b16 %v1229
    %v1262 = vunpack.c.l.b16 %v1230
    %v1263 = vunpack.c.l.b16 %v1231
    %v1264 = vunpack.c.l.b16 %v1232
    %v1265 = vunpack.c.l.b16 %v1233
    %v1266 = vunpack.c.l.b16 %v1234
    %v1267 = vunpack.c.l.b16 %v1235
    %v1268 = vunpack.c.l.b16 %v1236
    %v1269 = vunpack.c.l.b16 %v1237
    %v1270 = vunpack.c.l.b16 %v1238
    %v1271 = vunpack.c.l.b16 %v1239
    %v1272 = vpack.c.b16 %v1257, %v1256
    %v1273 = vpack.c.b16 %v1259, %v1258
    %v1274 = vpack.c.b16 %v1261, %v1260
    %v1275 = vpack.c.b16 %v1263, %v1262
    %v1276 = vpack.c.b16 %v1265, %v1264
    %v1277 = vpack.c.b16 %v1267, %v1266
    %v1278 = vpack.c.b16 %v1269, %v1268
    %v1279 = vpack.c.b16 %v1271, %v1270
    %1288 = vmatprep.subr.bf16.mxu0 0
    %1289 = vmatpush1.bf16.msra.mxu0 %v1272
    %1290 = vmatprep.subr.bf16.mxu0 0
    %1291 = vmatpush1.bf16.msra.mxu0 %v1273
    %1292 = vmatprep.subr.bf16.mxu0 0
    %1293 = vmatpush1.bf16.msra.mxu0 %v1274
    %1294 = vmatprep.subr.bf16.mxu0 0
    %1295 = vmatpush1.bf16.msra.mxu0 %v1275
    %1296 = vmatprep.subr.bf16.mxu0 0
    %1297 = vmatpush1.bf16.msra.mxu0 %v1276
    %1298 = vmatprep.subr.bf16.mxu0 0
    %1299 = vmatpush1.bf16.msra.mxu0 %v1277
    %1300 = vmatprep.subr.bf16.mxu0 0
    %1301 = vmatpush1.bf16.msra.mxu0 %v1278
    %1302 = vmatprep.subr.bf16.mxu0 0
    %1303 = vmatpush1.bf16.msra.mxu0 %v1279
    %1304 = vmatprep.subr.bf16.mxu0 0
    %1305 = vmatpush1.bf16.msra.mxu0 0
    %1306 = vmatprep.subr.bf16.mxu0 0
    %1307 = vmatpush1.bf16.msra.mxu0 0
    %1308 = vmatprep.subr.bf16.mxu0 0
    %1309 = vmatpush1.bf16.msra.mxu0 0
    %1310 = vmatprep.subr.bf16.mxu0 0
    %1311 = vmatpush1.bf16.msra.mxu0 0
    %1312 = vmatprep.subr.bf16.mxu0 0
    %1313 = vmatpush1.bf16.msra.mxu0 0
    %1314 = vmatprep.subr.bf16.mxu0 0
    %1315 = vmatpush1.bf16.msra.mxu0 0
    %1316 = vmatprep.subr.bf16.mxu0 0
    %1317 = vmatpush1.bf16.msra.mxu0 0
    %1318 = vmatprep.subr.bf16.mxu0 0
    %1319 = vmatpush1.bf16.msra.mxu0 0
    %1320 = vmatprep.mubr.bf16.mxu0 0
    %1321 = vmatmul.mubr.bf16.gmra.mrb[0].mxu0 %v1206
    %v1322 = vpop.f32.mrb[0].mxu0
    %v1323 = vadd.f32 0.0, %v1322
    %v1324 = vpop.f32.mrb[0].mxu0
    %v1325 = vpop.f32.mrb[0].mxu0
    %v1326 = vadd.f32 0.0, %v1325
    %v1327 = vpop.f32.mrb[0].mxu0
    %1328 = vmatprep.mubr.bf16.mxu0 0
    %1329 = vmatmul.mubr.bf16.gmra.mrb[0].mxu0 %v1207
    %v1330 = vpop.f32.mrb[0].mxu0
    %v1331 = vadd.f32 0.0, %v1330
    %v1332 = vpop.f32.mrb[0].mxu0
    %v1333 = vpop.f32.mrb[0].mxu0
    %v1334 = vadd.f32 0.0, %v1333
    %v1335 = vpop.f32.mrb[0].mxu0
    %1336 = vdwg.mxu0
    %v1353 = vunpack.c.l.b16 %v1208
    %v1354 = vunpack.c.l.b16 %v1209
    %v1355 = vunpack.c.l.b16 %v1210
    %v1356 = vunpack.c.l.b16 %v1211
    %v1357 = vunpack.c.l.b16 %v1212
    %v1358 = vunpack.c.l.b16 %v1213
    %v1359 = vunpack.c.l.b16 %v1214
    %v1360 = vunpack.c.l.b16 %v1215
    %v1361 = vunpack.c.l.b16 %v1216
    %v1362 = vunpack.c.l.b16 %v1217
    %v1363 = vunpack.c.l.b16 %v1218
    %v1364 = vunpack.c.l.b16 %v1219
    %v1365 = vunpack.c.l.b16 %v1220
    %v1366 = vunpack.c.l.b16 %v1221
    %v1367 = vunpack.c.l.b16 %v1222
    %v1368 = vunpack.c.l.b16 %v1223
    %v1369 = vpack.c.b16 %v1354, %v1353
    %v1370 = vpack.c.b16 %v1356, %v1355
    %v1371 = vpack.c.b16 %v1358, %v1357
    %v1372 = vpack.c.b16 %v1360, %v1359
    %v1373 = vpack.c.b16 %v1362, %v1361
    %v1374 = vpack.c.b16 %v1364, %v1363
    %v1375 = vpack.c.b16 %v1366, %v1365
    %v1376 = vpack.c.b16 %v1368, %v1367
    %1385 = vmatprep.subr.bf16.mxu0 0
    %1386 = vmatpush1.bf16.msra.mxu0 %v1369
    %1387 = vmatprep.subr.bf16.mxu0 0
    %1388 = vmatpush1.bf16.msra.mxu0 %v1370
    %1389 = vmatprep.subr.bf16.mxu0 0
    %1390 = vmatpush1.bf16.msra.mxu0 %v1371
    %1391 = vmatprep.subr.bf16.mxu0 0
    %1392 = vmatpush1.bf16.msra.mxu0 %v1372
    %1393 = vmatprep.subr.bf16.mxu0 0
    %1394 = vmatpush1.bf16.msra.mxu0 %v1373
    %1395 = vmatprep.subr.bf16.mxu0 0
    %1396 = vmatpush1.bf16.msra.mxu0 %v1374
    %1397 = vmatprep.subr.bf16.mxu0 0
    %1398 = vmatpush1.bf16.msra.mxu0 %v1375
    %1399 = vmatprep.subr.bf16.mxu0 0
    %1400 = vmatpush1.bf16.msra.mxu0 %v1376
    %1401 = vmatprep.subr.bf16.mxu0 0
    %1402 = vmatpush1.bf16.msra.mxu0 0
    %1403 = vmatprep.subr.bf16.mxu0 0
    %1404 = vmatpush1.bf16.msra.mxu0 0
    %1405 = vmatprep.subr.bf16.mxu0 0
    %1406 = vmatpush1.bf16.msra.mxu0 0
    %1407 = vmatprep.subr.bf16.mxu0 0
    %1408 = vmatpush1.bf16.msra.mxu0 0
    %1409 = vmatprep.subr.bf16.mxu0 0
    %1410 = vmatpush1.bf16.msra.mxu0 0
    %1411 = vmatprep.subr.bf16.mxu0 0
    %1412 = vmatpush1.bf16.msra.mxu0 0
    %1413 = vmatprep.subr.bf16.mxu0 0
    %1414 = vmatpush1.bf16.msra.mxu0 0
    %1415 = vmatprep.subr.bf16.mxu0 0
    %1416 = vmatpush1.bf16.msra.mxu0 0
    %1417 = vmatprep.mubr.bf16.mxu0 0
    %1418 = vmatmul.mubr.bf16.gmra.mrb[0].mxu0 %v1192
    %v1419 = vpop.f32.mrb[0].mxu0
    %v1420 = vadd.f32 %v1323, %v1419
    %v1421 = vpop.f32.mrb[0].mxu0
    %v1422 = vpop.f32.mrb[0].mxu0
    %v1423 = vadd.f32 %v1326, %v1422
    %v1424 = vpop.f32.mrb[0].mxu0
    %1425 = vmatprep.mubr.bf16.mxu0 0
    %1426 = vmatmul.mubr.bf16.gmra.mrb[0].mxu0 %v1193
    %v1427 = vpop.f32.mrb[0].mxu0
    %v1428 = vadd.f32 %v1331, %v1427
    %v1429 = vpop.f32.mrb[0].mxu0
    %v1430 = vpop.f32.mrb[0].mxu0
    %v1431 = vadd.f32 %v1334, %v1430
    %v1432 = vpop.f32.mrb[0].mxu0
    %1433 = vdwg.mxu0
    %1434 = vst [vmem:[#allocation10] sm:$0xff] %v1420
    %1435 = vst [vmem:[#allocation10 + $0x8] sm:$0xff] %v1423
    %1436 = vst [vmem:[#allocation10 + $0x10] sm:$0xff] %v1428
    %1437 = vst [vmem:[#allocation10 + $0x18] sm:$0xff] %v1431
    // Predicated region
    $region42: #{fft_shift_scheduler.1} parent=1 // pred_check
      _
    $region43: #{fft_shift_scheduler.1} parent=1 // pred_check_branch
      %1439 = sbr.rel (0) target = $region45
    $region44: #{fft_shift_scheduler.1} parent=1 // pred_region
      %s1441 = ssub.s32 512, 512
      %1442 = vsyncadd [#allocation4], %s1441
      %s1443 = sshll.u32 [#allocation10], 4
      %s1444 = int_to_ptr.vmem [resolvable:$true] %s1443
      %1449 = dma.vmem_to_hbm [thread:$0]  %s1444, 512, %s6, [#allocation4], 128, 128, 8
    $region45: #{fft_shift_scheduler.1} parent=1 // pred_fallthru
      _
    // Predicated region
    $region46: #{fft_shift_scheduler.1} parent=1 // pred_check
      _
    $region47: #{fft_shift_scheduler.1} parent=1 // pred_check_branch
      %1451 = sbr.rel (0) target = $region49
    $region48: #{fft_shift_scheduler.1} parent=1 // pred_region
      %1452 = dma.done [#allocation4], 512
    $region49: #{fft_shift_scheduler.1} parent=1 // pred_fallthru
      _
    %1453 = vsyncpa [#allocation3], 1
    %1454 = vsyncpa [#allocation6], 1
    %1455 = vsyncpa [#allocation9], 1
    %1456 = vsyncpa [#allocation4], 1

</llo_original>
